<compile_context>
chip_gen: v6e
topology: v6e:2x2x1
jax: 0.10.0
libtpu: 0.0.40
codegen_flags: <defaults>
</compile_context>

<pallas_src>
import functools

import jax
import jax.numpy as jnp
from jax.experimental import pallas as pl
from jax.experimental.pallas import tpu as pltpu


def _round_up(v: int, m: int) -> int:
    return (v + m - 1) // m * m


def _pick_tile(dim: int, candidates) -> int:
    for c in candidates:
        if c <= dim and dim % c == 0:
            return c
    return dim


def _vmem_bytes(K: int, d_in_pad: int, tm: int, tn: int) -> int:
    w_blk = 2 * K * d_in_pad * tn * 2   # bf16 weight-stack block, double-buffered
    x_blk = 2 * tm * d_in_pad * 4       # f32 x tile, double-buffered
    o_blk = 2 * tm * tn * 4             # f32 output tile, double-buffered
    b_blk = 2 * tn * 4                  # f32 bias row, double-buffered
    scratch = d_in_pad * tn * 2         # bf16 summed-weight scratch
    return w_blk + x_blk + o_blk + b_blk + scratch


def ensemble_kernel(x_ref, w_ref, b_ref, o_ref, w_sum_ref, *, inv_k):
    """Grid step (io, j, ii): one bf16 MXU matmul per (batch tile, column tile).

    The K-model weight sum for column tile j is computed once (at ii == 0) and
    cached in a bf16 VMEM scratch that stays resident across all batch tiles.
    """
    ii = pl.program_id(2)

    @pl.when(ii == 0)
    def _():
        # Sum the K weight tiles in f32 (VPU), cache as bf16 for the MXU.
        w_sum_ref[...] = jnp.sum(
            w_ref[...].astype(jnp.float32), axis=0
        ).astype(jnp.bfloat16)

    # bf16 x bf16 -> f32 accumulate: native MXU datapath on v6e/v7x.
    y = jnp.dot(
        x_ref[...].astype(jnp.bfloat16),
        w_sum_ref[...],
        preferred_element_type=jnp.float32,
    )
    # 1/K applied to the small (tm, tn) result; bias is the pre-averaged mean.
    o_ref[...] = (y * inv_k + b_ref[...]).astype(o_ref.dtype)


def make_ensemble_forward(w_stack, b_stack):
    """Builds forward(x) for an ensemble of K affine models.

    w_stack: (K, D_in, D_out); b_stack: (K, D_out).  Parameter padding and bias
    averaging happen ONCE here (hoisted out of the per-call path).
    """
    K, D_in, D_out = (int(s) for s in w_stack.shape)
    d_in_pad = _round_up(D_in, 128)
    d_out_pad = _round_up(D_out, 128)

    # One-time parameter preprocessing (zero padding is exact for affine maps).
    w_p = (
        jnp.zeros((K, d_in_pad, d_out_pad), jnp.bfloat16)
        .at[:, :D_in, :D_out]
        .set(w_stack.astype(jnp.bfloat16))
    )
    b_mean = jnp.mean(b_stack.astype(jnp.float32), axis=0)
    b_p = jnp.zeros((1, d_out_pad), jnp.float32).at[0, :D_out].set(b_mean)

    def _fwd(x, w_pad, b_pad):
        B, d_in_x = x.shape

        # --- tile planning (trace-time, static shapes) -----------------------
        tm = min(256, _round_up(B, 8))          # pad B up to the tile, not 8
        tn = _pick_tile(d_out_pad, (256, 128))  # 256 lanes is enough on all gens

        budget = 56 << 20  # conservative: fits v7x's 64 MiB physical VMEM
        while _vmem_bytes(K, d_in_pad, tm, tn) > budget and tn > 128:
            tn = max(128, tn // 2)
        while _vmem_bytes(K, d_in_pad, tm, tn) > budget and tm > 8:
            tm = max(8, ((tm // 2) + 7) // 8 * 8)

        b_padded = _round_up(B, tm)
        num_i = b_padded // tm
        num_j = d_out_pad // tn
        # v7x: split batch tiles over an outer "parallel" axis so both
        # TensorCores get work even when there is a single column tile.
        num_io = 2 if (num_i >= 2 and num_i % 2 == 0) else 1
        num_ii = num_i // num_io

        vmem_limit = min(
            max(int(_vmem_bytes(K, d_in_pad, tm, tn) * 1.4) + (2 << 20), 32 << 20),
            budget,
        )

        # --- per-call input padding (x only; parameters already padded) ------
        if (b_padded, d_in_pad) != (B, d_in_x):
            x_p = jnp.zeros((b_padded, d_in_pad), x.dtype).at[:B, :d_in_x].set(x)
        else:
            x_p = x

        kernel = functools.partial(ensemble_kernel, inv_k=1.0 / K)

        out_p = pl.pallas_call(
            kernel,
            out_shape=jax.ShapeDtypeStruct((b_padded, d_out_pad), x.dtype),
            grid_spec=pltpu.PrefetchScalarGridSpec(
                num_scalar_prefetch=0,
                grid=(num_io, num_j, num_ii),
                in_specs=[
                    # x tile: changes per batch tile (re-streamed per column tile;
                    # x is small relative to the weight stack).
                    pl.BlockSpec(
                        (tm, d_in_pad), lambda io, j, ii: (io * num_ii + ii, 0)
                    ),
                    # Full K weight stack for column tile j: constant across ii,
                    # so it is DMA'd once per (core, column tile).
                    pl.BlockSpec((K, d_in_pad, tn), lambda io, j, ii: (0, 0, j)),
                    # Pre-averaged bias row for column tile j.
                    pl.BlockSpec((1, tn), lambda io, j, ii: (0, j)),
                ],
                # Each grid step writes a distinct, lane-dense output tile.
                out_specs=pl.BlockSpec(
                    (tm, tn), lambda io, j, ii: (io * num_ii + ii, j)
                ),
                scratch_shapes=[pltpu.VMEM((d_in_pad, tn), jnp.bfloat16)],
            ),
            compiler_params=pltpu.CompilerParams(
                # io / j tiles are independent (megacore-shardable on v7x);
                # ii is sequential because of the resident weight-sum scratch.
                dimension_semantics=("parallel", "parallel", "arbitrary"),
                vmem_limit_bytes=vmem_limit,
            ),
        )(x_p, w_pad, b_pad)

        return out_p[:B, :D_out]

    fwd_jit = jax.jit(_fwd)
    return lambda x: fwd_jit(x, w_p, b_p)


def ensemble_reference(x, w_stack, b_stack):
    """Pure-JAX mirror of the PyTorch loop (sum each sub-model output, / K)."""
    K = w_stack.shape[0]
    result = None
    for k in range(K):
        y = x @ w_stack[k].astype(jnp.float32) + b_stack[k].astype(jnp.float32)
        result = y if result is None else result + y
    return result / K


if __name__ == "__main__":
    # Small deterministic problem: 3 sub-models, batch=4, D_in=32, D_out=16.
    K, B, D_IN, D_OUT = 3, 4, 32, 16

    key = jax.random.PRNGKey(0)
    kx, kw, kb = jax.random.split(key, 3)

    x = jax.random.normal(kx, (B, D_IN), dtype=jnp.float32)
    # Weights stored bf16 in HBM (halves weight-streaming bytes); averaging in
    # f32, matmul in bf16 on the MXU with f32 accumulation.
    w_stack = (
        jax.random.normal(kw, (K, D_IN, D_OUT), dtype=jnp.float32) * 0.1
    ).astype(jnp.bfloat16)
    b_stack = jax.random.normal(kb, (K, D_OUT), dtype=jnp.float32) * 0.1

    forward = make_ensemble_forward(w_stack, b_stack)
    out = jax.block_until_ready(forward(x))

    ref = ensemble_reference(x, w_stack, b_stack)
    assert out.shape == (B, D_OUT)
    # bf16 MXU operands (per perf review) -> relaxed tolerance vs f32 reference.
    assert jnp.allclose(out, ref, atol=2e-2, rtol=2e-2), "mismatch vs reference"

    print("KERNEL_OK")
</pallas_src>

<mosaic_0001>
module attributes {stable_mosaic.version = 11 : i64} {
  func.func @ensemble_kernel(%arg0: i32, %arg1: i32, %arg2: i32, %arg3: memref<8x128xf32, #tpu.memory_space<vmem>>, %arg4: memref<3x128x128xbf16, #tpu.memory_space<vmem>>, %arg5: memref<1x128xf32, #tpu.memory_space<vmem>>, %arg6: memref<8x128xf32, #tpu.memory_space<vmem>>, %arg7: memref<128x128xbf16, #tpu.memory_space<vmem>>) attributes {dimension_semantics = [#tpu.dimension_semantics<parallel>, #tpu.dimension_semantics<parallel>, #tpu.dimension_semantics<arbitrary>], iteration_bounds = array<i64: 1, 1, 1>, scalar_prefetch = 0 : i64, scratch_operands = 1 : i64, tpu.core_type = #tpu.core_type<tc>, window_params = [{transform_indices = @transform_0, window_bounds = array<i64: 8, 128>}, {transform_indices = @transform_1, window_bounds = array<i64: 3, 128, 128>}, {transform_indices = @transform_2, window_bounds = array<i64: 1, 128>}, {transform_indices = @transform_3, window_bounds = array<i64: 8, 128>}]} {
    %c0_i32 = arith.constant 0 : i32
    %0 = arith.cmpi eq, %arg2, %c0_i32 : i32
    %1 = arith.extui %0 : i1 to i32
    %c0_i32_0 = arith.constant 0 : i32
    %2 = arith.cmpi ne, %1, %c0_i32_0 : i32
    scf.if %2 {
      %c0_9 = arith.constant 0 : index
      %c0_10 = arith.constant 0 : index
      %c0_11 = arith.constant 0 : index
      %13 = vector.load %arg4[%c0_9, %c0_10, %c0_11] : memref<3x128x128xbf16, #tpu.memory_space<vmem>>, vector<3x128x128xbf16>
      %14 = arith.extf %13 : vector<3x128x128xbf16> to vector<3x128x128xf32>
      %cst_12 = arith.constant dense<0.000000e+00> : vector<128x128xf32>
      %15 = vector.multi_reduction <add>, %14, %cst_12 [0] : vector<3x128x128xf32> to vector<128x128xf32>
      %16 = arith.truncf %15 : vector<128x128xf32> to vector<128x128xbf16>
      %c0_13 = arith.constant 0 : index
      %c0_14 = arith.constant 0 : index
      %17 = vector.load %arg7[%c0_13, %c0_14] : memref<128x128xbf16, #tpu.memory_space<vmem>>, vector<128x128xbf16>
      tpu.vector_store %arg7[%c0_13, %c0_14], %16 {strides = array<i32>} : memref<128x128xbf16, #tpu.memory_space<vmem>>, vector<128x128xbf16>,
    } else {
    }
    %c0 = arith.constant 0 : index
    %c0_1 = arith.constant 0 : index
    %3 = vector.load %arg3[%c0, %c0_1] : memref<8x128xf32, #tpu.memory_space<vmem>>, vector<8x128xf32>
    %4 = arith.truncf %3 : vector<8x128xf32> to vector<8x128xbf16>
    %c0_2 = arith.constant 0 : index
    %c0_3 = arith.constant 0 : index
    %5 = vector.load %arg7[%c0_2, %c0_3] : memref<128x128xbf16, #tpu.memory_space<vmem>>, vector<128x128xbf16>
    %cst = arith.constant dense<0.000000e+00> : vector<8x128xf32>
    %6 = tpu.matmul %4, %5, %cst {dimension_numbers = #tpu.dot_dimension_numbers<[1], [0], [0], [1], [0, 0, 1, 1], [], []>} : vector<8x128xbf16>, vector<128x128xbf16>, vector<8x128xf32> -> vector<8x128xf32>
    %cst_4 = arith.constant 0.333333343 : f32
    %7 = vector.broadcast %cst_4 : f32 to vector<8x128xf32>
    %8 = arith.mulf %6, %7 : vector<8x128xf32>
    %c0_5 = arith.constant 0 : index
    %c0_6 = arith.constant 0 : index
    %9 = vector.load %arg5[%c0_5, %c0_6] : memref<1x128xf32, #tpu.memory_space<vmem>>, vector<1x128xf32>
    %10 = vector.broadcast %9 : vector<1x128xf32> to vector<8x128xf32>
    %11 = arith.addf %8, %10 : vector<8x128xf32>
    %c0_7 = arith.constant 0 : index
    %c0_8 = arith.constant 0 : index
    %12 = vector.load %arg6[%c0_7, %c0_8] : memref<8x128xf32, #tpu.memory_space<vmem>>, vector<8x128xf32>
    tpu.vector_store %arg6[%c0_7, %c0_8], %11 {strides = array<i32>} : memref<8x128xf32, #tpu.memory_space<vmem>>, vector<8x128xf32>,
    return
  }
  func.func @transform_0(%arg0: i32, %arg1: i32, %arg2: i32) -> (i32, i32) {
    %c1_i32 = arith.constant 1 : i32
    %0 = arith.muli %arg0, %c1_i32 : i32
    %1 = arith.addi %0, %arg2 : i32
    %c0_i32 = arith.constant 0 : i32
    %c0_i32_0 = arith.constant 0 : i32
    return %1, %c0_i32 : i32, i32
  }
  func.func @transform_1(%arg0: i32, %arg1: i32, %arg2: i32) -> (i32, i32, i32) {
    %c0_i32 = arith.constant 0 : i32
    %c0_i32_0 = arith.constant 0 : i32
    %c0_i32_1 = arith.constant 0 : i32
    return %c0_i32, %c0_i32_0, %arg1 : i32, i32, i32
  }
  func.func @transform_2(%arg0: i32, %arg1: i32, %arg2: i32) -> (i32, i32) {
    %c0_i32 = arith.constant 0 : i32
    %c0_i32_0 = arith.constant 0 : i32
    return %c0_i32, %arg1 : i32, i32
  }
  func.func @transform_3(%arg0: i32, %arg1: i32, %arg2: i32) -> (i32, i32) {
    %c1_i32 = arith.constant 1 : i32
    %0 = arith.muli %arg0, %c1_i32 : i32
    %1 = arith.addi %0, %arg2 : i32
    %c0_i32 = arith.constant 0 : i32
    return %1, %arg1 : i32, i32
  }
}

</mosaic_0001>

<llo_original>
// kernel: _fwd.1
$region0: #{_fwd.1}
  #allocation0 [shape = 'u32[]', space=smem, size = 0x4, offset = 0x4, fixed_abs, tag = 'smem constant byte address 0x4 - core index']
  #allocation1 [shape = 'u32[144,128]{1,0:T(1,128)}', space=vmem, size = 0x12000, scoped, tag = 'internal scratch']
  #allocation2 [shape = 'bf16[128,128]{1,0:T(8,128)(2,1)}', space=vmem, size = 0x8000, scoped, tag = 'scratch operand']
  %s0 = inlined_call_operand.vmem [shape: f32[8,128], index: 0, kind: input, shape index: {}]
  %s1 = inlined_call_operand.hbm [shape: bf16[3,128,128], index: 1, kind: input, shape index: {}]
  %s2 = inlined_call_operand.vmem [shape: f32[1,128], index: 2, kind: input, shape index: {}]
  %s3 = inlined_call_operand.vmem [shape: f32[8,128], index: 3, kind: output, shape index: {}]
  %s4 = sld [smem:[#allocation0]]
  $region30: #{_fwd.1} parent=0
    _
  %s6 = ssub.s32 1, %s4
  %s7 = scalar_select 0, %s6, %s4
  $region1: #{_fwd.1} parent=0
    #allocation3 [shape = 'u8[98304]{0}', space=vmem, size = 0x18000, scoped, tag = 'input window, operand 1, single buffered']
    #allocation4 [shape = 's32[1]{0}', space=sflag, size = 0x4, scoped, tag = 'scoped memory for _fwd.1']
    %8 = vsyncpa [#allocation4], 0
    // Predicated region
    $region2: #{_fwd.1} parent=1 // pred_check
      _
    $region3: #{_fwd.1} parent=1 // pred_check_branch
      %10 = sbr.rel (0) target = $region5
    $region4: #{_fwd.1} parent=1 // pred_region
      %s11 = sadd.s32 0, 0
      %p12 = scmp.lt.s32.totalorder %s11, 0
      %s13 = scalar_select %p12, %s11, 0
      %s14 = smul.addr %s13, 8
      %s15 = scalar_lea.vmem %s0, %s14
      %s16 = sadd.s32 0, 0
    $region5: #{_fwd.1} parent=1 // pred_fallthru
      _
    // Predicated region
    $region6: #{_fwd.1} parent=1 // pred_check
      _
    $region7: #{_fwd.1} parent=1 // pred_check_branch
      %18 = sbr.rel (0) target = $region9
    $region8: #{_fwd.1} parent=1 // pred_region
      %s20 = ssub.s32 3072, 3072
      %21 = vsyncadd [#allocation4], %s20
      %s22 = sshll.u32 [#allocation3], 4
      %s23 = int_to_ptr.vmem [resolvable:$true] %s22
      %28 = dma.hbm_to_vmem [thread:$0]  %s1, 3072, %s23, [#allocation4], 64, 64, 4
    $region9: #{_fwd.1} parent=1 // pred_fallthru
      _
    // Predicated region
    $region10: #{_fwd.1} parent=1 // pred_check
      _
    $region11: #{_fwd.1} parent=1 // pred_check_branch
      %30 = sbr.rel (0) target = $region13
    $region12: #{_fwd.1} parent=1 // pred_region
      _
    $region13: #{_fwd.1} parent=1 // pred_fallthru
      _
    // Predicated region
    $region14: #{_fwd.1} parent=1 // pred_check
      _
    $region15: #{_fwd.1} parent=1 // pred_check_branch
      %32 = sbr.rel (0) target = $region17
    $region16: #{_fwd.1} parent=1 // pred_region
      %33 = dma.done [#allocation4], 3072
    $region17: #{_fwd.1} parent=1 // pred_fallthru
      _
    %s34 = sadd.s32 0, 0
    %p35 = scmp.lt.s32.totalorder %s34, 0
    %s36 = scalar_select %p35, %s34, 0
    %s37 = smul.addr %s36, 8
    %s38 = scalar_lea.vmem %s0, %s37
    %s39 = sadd.s32 0, 0
    %p40 = scmp.lt.s32.totalorder %s39, 0
    %s41 = scalar_select %p40, %s39, 0
    %s42 = smul.addr %s41, 8
    %s43 = scalar_lea.vmem %s3, %s42
    %s44 = sadd.s32 0, 0
    %p45 = scmp.lt.s32.totalorder %s44, 0
    %s46 = scalar_select %p45, %s44, 0
    %s47 = smul.addr %s46, 8
    %s48 = scalar_lea.vmem %s0, %s47
    %s49 = sadd.s32 0, 0
    %s50 = sadd.s32 0, 0
    %p51 = scmp.lt.s32.totalorder %s50, 0
    %s52 = scalar_select %p51, %s50, 0
    %s53 = smul.addr %s52, 8
    %s54 = scalar_lea.vmem %s3, %s53
    %s55 = sadd.s32 0, 0
    %p57 = scmp.eq.s32.totalorder 0, 0
    // Predicated region
    $region18: #{_fwd.1} parent=1 // pred_check
      %p58 = pneg %p57
    $region19: #{_fwd.1} parent=1 // pred_check_branch
      %60 = sbr.rel (%p58) target = $region21
    $region20: #{_fwd.1} parent=1 // pred_region
      %v61 = vld [vmem:[#allocation3] sm:$0xf]
      %v62 = vld [vmem:[#allocation3 + $0x4] sm:$0xf]
      %v63 = vld [vmem:[#allocation3 + $0x8] sm:$0xf]
      %v64 = vld [vmem:[#allocation3 + $0xc] sm:$0xf]
      %v65 = vld [vmem:[#allocation3 + $0x10] sm:$0xf]
      %v66 = vld [vmem:[#allocation3 + $0x14] sm:$0xf]
      %v67 = vld [vmem:[#allocation3 + $0x18] sm:$0xf]
      %v68 = vld [vmem:[#allocation3 + $0x1c] sm:$0xf]
      %v69 = vld [vmem:[#allocation3 + $0x20] sm:$0xf]
      %v70 = vld [vmem:[#allocation3 + $0x24] sm:$0xf]
      %v71 = vld [vmem:[#allocation3 + $0x28] sm:$0xf]
      %v72 = vld [vmem:[#allocation3 + $0x2c] sm:$0xf]
      %v73 = vld [vmem:[#allocation3 + $0x30] sm:$0xf]
      %v74 = vld [vmem:[#allocation3 + $0x34] sm:$0xf]
      %v75 = vld [vmem:[#allocation3 + $0x38] sm:$0xf]
      %v76 = vld [vmem:[#allocation3 + $0x3c] sm:$0xf]
      %v77 = vld [vmem:[#allocation3 + $0x40] sm:$0xf]
      %v78 = vld [vmem:[#allocation3 + $0x44] sm:$0xf]
      %v79 = vld [vmem:[#allocation3 + $0x48] sm:$0xf]
      %v80 = vld [vmem:[#allocation3 + $0x4c] sm:$0xf]
      %v81 = vld [vmem:[#allocation3 + $0x50] sm:$0xf]
      %v82 = vld [vmem:[#allocation3 + $0x54] sm:$0xf]
      %v83 = vld [vmem:[#allocation3 + $0x58] sm:$0xf]
      %v84 = vld [vmem:[#allocation3 + $0x5c] sm:$0xf]
      %v85 = vld [vmem:[#allocation3 + $0x60] sm:$0xf]
      %v86 = vld [vmem:[#allocation3 + $0x64] sm:$0xf]
      %v87 = vld [vmem:[#allocation3 + $0x68] sm:$0xf]
      %v88 = vld [vmem:[#allocation3 + $0x6c] sm:$0xf]
      %v89 = vld [vmem:[#allocation3 + $0x70] sm:$0xf]
      %v90 = vld [vmem:[#allocation3 + $0x74] sm:$0xf]
      %v91 = vld [vmem:[#allocation3 + $0x78] sm:$0xf]
      %v92 = vld [vmem:[#allocation3 + $0x7c] sm:$0xf]
      %v93 = vld [vmem:[#allocation3 + $0x80] sm:$0xf]
      %v94 = vld [vmem:[#allocation3 + $0x84] sm:$0xf]
      %v95 = vld [vmem:[#allocation3 + $0x88] sm:$0xf]
      %v96 = vld [vmem:[#allocation3 + $0x8c] sm:$0xf]
      %v97 = vld [vmem:[#allocation3 + $0x90] sm:$0xf]
      %v98 = vld [vmem:[#allocation3 + $0x94] sm:$0xf]
      %v99 = vld [vmem:[#allocation3 + $0x98] sm:$0xf]
      %v100 = vld [vmem:[#allocation3 + $0x9c] sm:$0xf]
      %v101 = vld [vmem:[#allocation3 + $0xa0] sm:$0xf]
      %v102 = vld [vmem:[#allocation3 + $0xa4] sm:$0xf]
      %v103 = vld [vmem:[#allocation3 + $0xa8] sm:$0xf]
      %v104 = vld [vmem:[#allocation3 + $0xac] sm:$0xf]
      %v105 = vld [vmem:[#allocation3 + $0xb0] sm:$0xf]
      %v106 = vld [vmem:[#allocation3 + $0xb4] sm:$0xf]
      %v107 = vld [vmem:[#allocation3 + $0xb8] sm:$0xf]
      %v108 = vld [vmem:[#allocation3 + $0xbc] sm:$0xf]
      %v109 = vunpack.c.l.bf16 %v61
      %v110 = vunpack.c.l.bf16 %v62
      %v111 = vunpack.c.l.bf16 %v63
      %v112 = vunpack.c.l.bf16 %v64
      %v113 = vunpack.c.l.bf16 %v65
      %v114 = vunpack.c.l.bf16 %v66
      %v115 = vunpack.c.l.bf16 %v67
      %v116 = vunpack.c.l.bf16 %v68
      %v117 = vunpack.c.l.bf16 %v69
      %v118 = vunpack.c.l.bf16 %v70
      %v119 = vunpack.c.l.bf16 %v71
      %v120 = vunpack.c.l.bf16 %v72
      %v121 = vunpack.c.l.bf16 %v73
      %v122 = vunpack.c.l.bf16 %v74
      %v123 = vunpack.c.l.bf16 %v75
      %v124 = vunpack.c.l.bf16 %v76
      %v125 = vunpack.c.l.bf16 %v77
      %v126 = vunpack.c.l.bf16 %v78
      %v127 = vunpack.c.l.bf16 %v79
      %v128 = vunpack.c.l.bf16 %v80
      %v129 = vunpack.c.l.bf16 %v81
      %v130 = vunpack.c.l.bf16 %v82
      %v131 = vunpack.c.l.bf16 %v83
      %v132 = vunpack.c.l.bf16 %v84
      %v133 = vunpack.c.l.bf16 %v85
      %v134 = vunpack.c.l.bf16 %v86
      %v135 = vunpack.c.l.bf16 %v87
      %v136 = vunpack.c.l.bf16 %v88
      %v137 = vunpack.c.l.bf16 %v89
      %v138 = vunpack.c.l.bf16 %v90
      %v139 = vunpack.c.l.bf16 %v91
      %v140 = vunpack.c.l.bf16 %v92
      %v141 = vunpack.c.l.bf16 %v93
      %v142 = vunpack.c.l.bf16 %v94
      %v143 = vunpack.c.l.bf16 %v95
      %v144 = vunpack.c.l.bf16 %v96
      %v145 = vunpack.c.l.bf16 %v97
      %v146 = vunpack.c.l.bf16 %v98
      %v147 = vunpack.c.l.bf16 %v99
      %v148 = vunpack.c.l.bf16 %v100
      %v149 = vunpack.c.l.bf16 %v101
      %v150 = vunpack.c.l.bf16 %v102
      %v151 = vunpack.c.l.bf16 %v103
      %v152 = vunpack.c.l.bf16 %v104
      %v153 = vunpack.c.l.bf16 %v105
      %v154 = vunpack.c.l.bf16 %v106
      %v155 = vunpack.c.l.bf16 %v107
      %v156 = vunpack.c.l.bf16 %v108
      %v157 = vadd.f32 %v109, %v125
      %v158 = vadd.f32 %v157, %v141
      %v159 = vadd.f32 %v110, %v126
      %v160 = vadd.f32 %v159, %v142
      %v161 = vadd.f32 %v111, %v127
      %v162 = vadd.f32 %v161, %v143
      %v163 = vadd.f32 %v112, %v128
      %v164 = vadd.f32 %v163, %v144
      %v165 = vadd.f32 %v113, %v129
      %v166 = vadd.f32 %v165, %v145
      %v167 = vadd.f32 %v114, %v130
      %v168 = vadd.f32 %v167, %v146
      %v169 = vadd.f32 %v115, %v131
      %v170 = vadd.f32 %v169, %v147
      %v171 = vadd.f32 %v116, %v132
      %v172 = vadd.f32 %v171, %v148
      %v173 = vadd.f32 %v117, %v133
      %v174 = vadd.f32 %v173, %v149
      %v175 = vadd.f32 %v118, %v134
      %v176 = vadd.f32 %v175, %v150
      %v177 = vadd.f32 %v119, %v135
      %v178 = vadd.f32 %v177, %v151
      %v179 = vadd.f32 %v120, %v136
      %v180 = vadd.f32 %v179, %v152
      %v181 = vadd.f32 %v121, %v137
      %v182 = vadd.f32 %v181, %v153
      %v183 = vadd.f32 %v122, %v138
      %v184 = vadd.f32 %v183, %v154
      %v185 = vadd.f32 %v123, %v139
      %v186 = vadd.f32 %v185, %v155
      %v187 = vadd.f32 %v124, %v140
      %v188 = vadd.f32 %v187, %v156
      %v189 = vpack.c.bf16 %v160, %v158
      %v190 = vpack.c.bf16 %v164, %v162
      %v191 = vpack.c.bf16 %v168, %v166
      %v192 = vpack.c.bf16 %v172, %v170
      %v193 = vpack.c.bf16 %v176, %v174
      %v194 = vpack.c.bf16 %v180, %v178
      %v195 = vpack.c.bf16 %v184, %v182
      %v196 = vpack.c.bf16 %v188, %v186
      %v205 = vunpack.c.l.b16 %v189
      %v206 = vunpack.c.h.b16 %v189
      %v207 = vunpack.c.l.b16 %v190
      %v208 = vunpack.c.h.b16 %v190
      %v209 = vunpack.c.l.b16 %v191
      %v210 = vunpack.c.h.b16 %v191
      %v211 = vunpack.c.l.b16 %v192
      %v212 = vunpack.c.h.b16 %v192
      %v213 = vunpack.c.l.b16 %v193
      %v214 = vunpack.c.h.b16 %v193
      %v215 = vunpack.c.l.b16 %v194
      %v216 = vunpack.c.h.b16 %v194
      %v217 = vunpack.c.l.b16 %v195
      %v218 = vunpack.c.h.b16 %v195
      %v219 = vunpack.c.l.b16 %v196
      %v220 = vunpack.c.h.b16 %v196
      %v221 = vpack.c.b16 %v205, %v205
      %v222 = vpack.c.b16 %v206, %v206
      %v223 = vpack.c.b16 %v207, %v207
      %v224 = vpack.c.b16 %v208, %v208
      %v225 = vpack.c.b16 %v209, %v209
      %v226 = vpack.c.b16 %v210, %v210
      %v227 = vpack.c.b16 %v211, %v211
      %v228 = vpack.c.b16 %v212, %v212
      %v229 = vpack.c.b16 %v213, %v213
      %v230 = vpack.c.b16 %v214, %v214
      %v231 = vpack.c.b16 %v215, %v215
      %v232 = vpack.c.b16 %v216, %v216
      %v233 = vpack.c.b16 %v217, %v217
      %v234 = vpack.c.b16 %v218, %v218
      %v235 = vpack.c.b16 %v219, %v219
      %v236 = vpack.c.b16 %v220, %v220
      %253 = vst [vmem:[#allocation2] sm:$0xf] %v221
      %254 = vst [vmem:[#allocation2 + $0x4] sm:$0xf] %v222
      %255 = vst [vmem:[#allocation2 + $0x8] sm:$0xf] %v223
      %256 = vst [vmem:[#allocation2 + $0xc] sm:$0xf] %v224
      %257 = vst [vmem:[#allocation2 + $0x10] sm:$0xf] %v225
      %258 = vst [vmem:[#allocation2 + $0x14] sm:$0xf] %v226
      %259 = vst [vmem:[#allocation2 + $0x18] sm:$0xf] %v227
      %260 = vst [vmem:[#allocation2 + $0x1c] sm:$0xf] %v228
      %261 = vst [vmem:[#allocation2 + $0x20] sm:$0xf] %v229
      %262 = vst [vmem:[#allocation2 + $0x24] sm:$0xf] %v230
      %263 = vst [vmem:[#allocation2 + $0x28] sm:$0xf] %v231
      %264 = vst [vmem:[#allocation2 + $0x2c] sm:$0xf] %v232
      %265 = vst [vmem:[#allocation2 + $0x30] sm:$0xf] %v233
      %266 = vst [vmem:[#allocation2 + $0x34] sm:$0xf] %v234
      %267 = vst [vmem:[#allocation2 + $0x38] sm:$0xf] %v235
      %268 = vst [vmem:[#allocation2 + $0x3c] sm:$0xf] %v236
    $region21: #{_fwd.1} parent=1 // pred_fallthru
      _
    %v269 = vld [vmem:[%s48] sm:$0xff]
    %v270 = vpack.c.bf16 %v269, %v269
    %v271 = vld [vmem:[#allocation2] sm:$0xf]
    %v272 = vld [vmem:[#allocation2 + $0x4] sm:$0xf]
    %v273 = vld [vmem:[#allocation2 + $0x8] sm:$0xf]
    %v274 = vld [vmem:[#allocation2 + $0xc] sm:$0xf]
    %v275 = vld [vmem:[#allocation2 + $0x10] sm:$0xf]
    %v276 = vld [vmem:[#allocation2 + $0x14] sm:$0xf]
    %v277 = vld [vmem:[#allocation2 + $0x18] sm:$0xf]
    %v278 = vld [vmem:[#allocation2 + $0x1c] sm:$0xf]
    %v279 = vld [vmem:[#allocation2 + $0x20] sm:$0xf]
    %v280 = vld [vmem:[#allocation2 + $0x24] sm:$0xf]
    %v281 = vld [vmem:[#allocation2 + $0x28] sm:$0xf]
    %v282 = vld [vmem:[#allocation2 + $0x2c] sm:$0xf]
    %v283 = vld [vmem:[#allocation2 + $0x30] sm:$0xf]
    %v284 = vld [vmem:[#allocation2 + $0x34] sm:$0xf]
    %v285 = vld [vmem:[#allocation2 + $0x38] sm:$0xf]
    %v286 = vld [vmem:[#allocation2 + $0x3c] sm:$0xf]
    %v303 = vunpack.c.l.b16 %v271
    %v304 = vunpack.c.l.b16 %v272
    %v305 = vunpack.c.l.b16 %v273
    %v306 = vunpack.c.l.b16 %v274
    %v307 = vunpack.c.l.b16 %v275
    %v308 = vunpack.c.l.b16 %v276
    %v309 = vunpack.c.l.b16 %v277
    %v310 = vunpack.c.l.b16 %v278
    %v311 = vunpack.c.l.b16 %v279
    %v312 = vunpack.c.l.b16 %v280
    %v313 = vunpack.c.l.b16 %v281
    %v314 = vunpack.c.l.b16 %v282
    %v315 = vunpack.c.l.b16 %v283
    %v316 = vunpack.c.l.b16 %v284
    %v317 = vunpack.c.l.b16 %v285
    %v318 = vunpack.c.l.b16 %v286
    %v319 = vpack.c.b16 %v304, %v303
    %v320 = vpack.c.b16 %v306, %v305
    %v321 = vpack.c.b16 %v308, %v307
    %v322 = vpack.c.b16 %v310, %v309
    %v323 = vpack.c.b16 %v312, %v311
    %v324 = vpack.c.b16 %v314, %v313
    %v325 = vpack.c.b16 %v316, %v315
    %v326 = vpack.c.b16 %v318, %v317
    %335 = vmatprep.subr.bf16.mxu0 0
    %336 = vmatpush1.bf16.msra.mxu0 %v326
    %337 = vmatprep.subr.bf16.mxu0 0
    %338 = vmatpush1.bf16.msra.mxu0 %v325
    %339 = vmatprep.subr.bf16.mxu0 0
    %340 = vmatpush1.bf16.msra.mxu0 %v324
    %341 = vmatprep.subr.bf16.mxu0 0
    %342 = vmatpush1.bf16.msra.mxu0 %v323
    %343 = vmatprep.subr.bf16.mxu0 0
    %344 = vmatpush1.bf16.msra.mxu0 %v322
    %345 = vmatprep.subr.bf16.mxu0 0
    %346 = vmatpush1.bf16.msra.mxu0 %v321
    %347 = vmatprep.subr.bf16.mxu0 0
    %348 = vmatpush1.bf16.msra.mxu0 %v320
    %349 = vmatprep.subr.bf16.mxu0 0
    %350 = vmatpush1.bf16.msra.mxu0 %v319
    %351 = vmatprep.subr.bf16.mxu0 0
    %352 = vmatpush2.bf16.msra.mxu0 0
    %353 = vmatprep.subr.bf16.mxu0 0
    %354 = vmatpush2.bf16.msra.mxu0 0
    %355 = vmatprep.subr.bf16.mxu0 0
    %356 = vmatpush2.bf16.msra.mxu0 0
    %357 = vmatprep.subr.bf16.mxu0 0
    %358 = vmatpush2.bf16.msra.mxu0 0
    %359 = vmatprep.subr.bf16.mxu0 0
    %360 = vmatpush2.bf16.msra.mxu0 0
    %361 = vmatprep.subr.bf16.mxu0 0
    %362 = vmatpush2.bf16.msra.mxu0 0
    %363 = vmatprep.subr.bf16.mxu0 0
    %364 = vmatpush2.bf16.msra.mxu0 0
    %365 = vmatprep.subr.bf16.mxu0 0
    %366 = vmatpush2.bf16.msra.mxu0 0
    %367 = vmatprep.mubr.bf16.mxu0 0
    %368 = vmatmul.mubr.bf16.gmra.mxu0 %v270
    %v369 = vpop.f32.mrf.mxu0
    %v370 = vadd.f32 0.0, %v369
    %v371 = vpop.f32.mrf.mxu0
    %v372 = vpop.f32.mrf.mxu0
    %v373 = vpop.f32.mrf.mxu0
    %374 = vdwg.mxu0
    %v375 = vmul.f32 %v370, 0.33333334
    %v376 = vld [vmem:[%s2] sm:$0x1]
    %v378 = vlaneseq
    %v379 = vshrl.u32 %v378, 7
    %v380 = vsub.s32 0, %v379
    %v381 = vrot.slane %v376, %v380
    %v383 = vadd.f32 %v375, %v381
    %384 = vst [vmem:[%s54] sm:$0xff] %v383
    %s385 = sadd.s32 0, 0
    %p386 = scmp.lt.s32.totalorder %s385, 0
    %s387 = scalar_select %p386, %s385, 0
    %s388 = smul.addr %s387, 8
    %s389 = scalar_lea.vmem %s3, %s388
    // Predicated region
    $region22: #{_fwd.1} parent=1 // pred_check
      _
    $region23: #{_fwd.1} parent=1 // pred_check_branch
      %391 = sbr.rel (0) target = $region25
    $region24: #{_fwd.1} parent=1 // pred_region
      %s392 = sadd.s32 0, 0
    $region25: #{_fwd.1} parent=1 // pred_fallthru
      _
    // Predicated region
    $region26: #{_fwd.1} parent=1 // pred_check
      _
    $region27: #{_fwd.1} parent=1 // pred_check_branch
      %394 = sbr.rel (0) target = $region29
    $region28: #{_fwd.1} parent=1 // pred_region
      %s395 = sadd.s32 0, 0
      %p396 = scmp.lt.s32.totalorder %s395, 0
      %s397 = scalar_select %p396, %s395, 0
      %s398 = smul.addr %s397, 8
      %s399 = scalar_lea.vmem %s3, %s398
    $region29: #{_fwd.1} parent=1 // pred_fallthru
      _
    %400 = vsyncpa [#allocation4], 1

</llo_original>
